<compile_context>
chip_gen: v7x
topology: tpu7x:2x2x1
jax: 0.10.0
libtpu: 0.0.40
codegen_flags: <defaults>
</compile_context>

<pallas_src>
import jax
import jax.numpy as jnp
from jax.experimental import pallas as pl
from jax.experimental.pallas import tpu as pltpu


def _round_up(x: int, m: int) -> int:
    return ((x + m - 1) // m) * m


# ----------------------------------------------------------------------------
# Kernel body: fused 3-layer MLP on one batch tile.
# ----------------------------------------------------------------------------
def _mlp_kernel(bel_ref, st_ref, w1a_ref, w1b_ref, b1_ref,
                w2_ref, b2_ref, w3_ref, b3_ref, out_ref):
    # fc1 as split-K over the (belief | state) concat; f32 accumulation.
    h = jnp.dot(bel_ref[...], w1a_ref[...], preferred_element_type=jnp.float32)
    h = h + jnp.dot(st_ref[...], w1b_ref[...], preferred_element_type=jnp.float32)
    h = jnp.maximum(h + b1_ref[...], 0.0)                 # bias + relu in f32

    # fc2 (cast back to weight/compute dtype for the MXU; no-op for f32).
    h = jnp.dot(h.astype(w2_ref.dtype), w2_ref[...],
                preferred_element_type=jnp.float32)
    h = jnp.maximum(h + b2_ref[...], 0.0)

    # fc3 (no activation).
    o = jnp.dot(h.astype(w3_ref.dtype), w3_ref[...],
                preferred_element_type=jnp.float32) + b3_ref[...]
    out_ref[...] = o.astype(out_ref.dtype)


# ----------------------------------------------------------------------------
# One-time parameter preparation (hoisted out of the per-call wrapper).
# ----------------------------------------------------------------------------
def prepare_params(params, belief_size, *, compute_dtype=None):
    """Pad / split the torch-Linear weights once.

    params: w1 (Din,E), b1 (E,), w2 (E,E), b2 (E,), w3 (E,O), b3 (O,), stored
    [in, out] (already transposed relative to torch.nn.Linear). w1 is split on
    the K axis into the belief and state halves so the kernel needs no concat.
    Weights are kept in their own dtype unless `compute_dtype` is given
    (e.g. jnp.bfloat16 for the fast MXU path); biases stay float32 so the
    bias-add / ReLU epilogue is always f32.
    """
    w1, b1 = params["w1"], params["b1"]
    w2, b2 = params["w2"], params["b2"]
    w3, b3 = params["w3"], params["b3"]
    w_dtype = jnp.dtype(compute_dtype) if compute_dtype is not None else w1.dtype

    Din, E = w1.shape
    O = w3.shape[1]
    Hb = int(belief_size)
    Hs = Din - Hb
    E_p = _round_up(E, 128)
    O_p = _round_up(O, 128)

    def pad_w(w, rows, cols):
        return jnp.pad(w, ((0, rows - w.shape[0]), (0, cols - w.shape[1]))).astype(w_dtype)

    def pad_b(b, cols):
        return jnp.pad(b, (0, cols - b.shape[0])).reshape(1, cols).astype(jnp.float32)

    return {
        "w1a": pad_w(w1[:Hb], Hb, E_p),     # belief half of fc1
        "w1b": pad_w(w1[Hb:], Hs, E_p),     # state  half of fc1
        "b1": pad_b(b1, E_p),
        "w2": pad_w(w2, E_p, E_p),
        "b2": pad_b(b2, E_p),
        "w3": pad_w(w3, E_p, O_p),
        "b3": pad_b(b3, O_p),
        "dims": (Hb, Hs, E, O, E_p, O_p),   # static metadata
    }


def _choose_batch_tile(B, max_batch_tile):
    # Keep >= 2 grid steps once B allows it (v7x megacore can shard the
    # "parallel" batch axis across its 2 TensorCores) while minimizing
    # batch-padding waste and capping the tile size.
    n_tiles = max(2, pl.cdiv(B, max_batch_tile))
    return max(_round_up(pl.cdiv(B, n_tiles), 8), 8)


def _vmem_limit_bytes(TB, Hb, Hs, E_p, O_p, act_itemsize, out_itemsize):
    io = 2 * TB * (Hb + Hs) * act_itemsize + 2 * TB * O_p * out_itemsize  # dbl-buffered tiles
    wts = (Hb * E_p + Hs * E_p + E_p * E_p + E_p * O_p) * act_itemsize    # single-buffered
    wts += (2 * E_p + O_p) * 8 * 4                                        # f32 biases (sublane pad)
    scratch = 2 * TB * E_p * 4                                            # live f32 hidden
    need = io + wts + scratch
    # Headroom, but never below the default scoped limit and never above the
    # v7x physical 64 MiB VMEM.
    return int(min(max(2 * need + (4 << 20), 32 << 20), 60 << 20))


# ----------------------------------------------------------------------------
# Forward pass.
# ----------------------------------------------------------------------------
def symbolic_observation_model(belief, state, prepared, *, max_batch_tile=1024):
    """Fused 3-layer MLP observation model.

    belief: (..., belief_size), state: (..., state_size) with matching leading
    dims; all leading dims are flattened into one batch (single launch).
    `prepared` comes from `prepare_params` (padding hoisted out of this call).
    """
    Hb, Hs, E, O, E_p, O_p = prepared["dims"]
    assert belief.shape[-1] == Hb and state.shape[-1] == Hs
    assert belief.shape[:-1] == state.shape[:-1]
    lead_shape = belief.shape[:-1]
    out_dtype = belief.dtype
    act_dtype = prepared["w1a"].dtype      # compute dtype chosen at prepare time

    bel2 = belief.reshape(-1, Hb).astype(act_dtype)
    st2 = state.reshape(-1, Hs).astype(act_dtype)
    B = bel2.shape[0]

    TB = _choose_batch_tile(B, max_batch_tile)
    B_p = _round_up(B, TB)
    if B_p != B:                            # pad batch only when needed
        bel2 = jnp.pad(bel2, ((0, B_p - B), (0, 0)))
        st2 = jnp.pad(st2, ((0, B_p - B), (0, 0)))

    # Constant-index, single-buffered (resident) weight/bias specs.
    resident = lambda shape: pl.BlockSpec(shape, lambda i: (0,) * len(shape),
                                          pipeline_mode=pl.Buffered(1))

    vmem_limit = _vmem_limit_bytes(TB, Hb, Hs, E_p, O_p,
                                   jnp.dtype(act_dtype).itemsize,
                                   jnp.dtype(out_dtype).itemsize)

    out_padded = pl.pallas_call(
        _mlp_kernel,
        out_shape=jax.ShapeDtypeStruct((B_p, O_p), out_dtype),
        grid=(B_p // TB,),
        in_specs=[
            pl.BlockSpec((TB, Hb), lambda i: (i, 0)),      # belief tile (pipelined)
            pl.BlockSpec((TB, Hs), lambda i: (i, 0)),      # state tile  (pipelined)
            resident((Hb, E_p)),                           # w1a
            resident((Hs, E_p)),                           # w1b
            resident((1, E_p)),                            # b1 (f32)
            resident((E_p, E_p)),                          # w2
            resident((1, E_p)),                            # b2 (f32)
            resident((E_p, O_p)),                          # w3
            resident((1, O_p)),                            # b3 (f32)
        ],
        out_specs=pl.BlockSpec((TB, O_p), lambda i: (i, 0)),
        compiler_params=pltpu.CompilerParams(
            dimension_semantics=("parallel",),
            vmem_limit_bytes=vmem_limit,
        ),
    )(bel2, st2, prepared["w1a"], prepared["w1b"], prepared["b1"],
      prepared["w2"], prepared["b2"], prepared["w3"], prepared["b3"])

    out = out_padded
    if B_p != B or O_p != O:                # skip the slice copy when possible
        out = out[:B, :O]
    return out.reshape(*lead_shape, O)


# ----------------------------------------------------------------------------
# Synthetic parameters + pure-JAX reference.
# ----------------------------------------------------------------------------
def init_params(key, belief_size, state_size, embedding_size, observation_size,
                dtype=jnp.float32):
    """Deterministic synthetic parameters (shapes follow the torch module)."""
    din = belief_size + state_size
    ks = jax.random.split(key, 6)

    def linear(kw, kb, fan_in, fan_out):
        bound = 1.0 / jnp.sqrt(fan_in)
        w = jax.random.uniform(kw, (fan_in, fan_out), dtype, -bound, bound)
        b = jax.random.uniform(kb, (fan_out,), dtype, -bound, bound)
        return w, b

    w1, b1 = linear(ks[0], ks[1], din, embedding_size)
    w2, b2 = linear(ks[2], ks[3], embedding_size, embedding_size)
    w3, b3 = linear(ks[4], ks[5], embedding_size, observation_size)
    return {"w1": w1, "b1": b1, "w2": w2, "b2": b2, "w3": w3, "b3": b3}


def _reference(belief, state, p):
    x = jnp.concatenate([belief, state], axis=-1)
    h = jnp.maximum(x @ p["w1"] + p["b1"], 0.0)
    h = jnp.maximum(h @ p["w2"] + p["b2"], 0.0)
    return h @ p["w3"] + p["b3"]


if __name__ == "__main__":
    # Small shapes consistent with the module's forward.
    batch = 2
    belief_size = 32
    state_size = 16
    embedding_size = 32
    observation_size = 24

    key = jax.random.PRNGKey(0)
    k_b, k_s, k_p, k_b2, k_s2 = jax.random.split(key, 5)
    belief = jax.random.normal(k_b, (batch, belief_size), jnp.float32)
    state = jax.random.normal(k_s, (batch, state_size), jnp.float32)
    params = init_params(k_p, belief_size, state_size, embedding_size,
                         observation_size)

    # Prepare (pad/split) weights once; reuse across all forward calls.
    prepared = prepare_params(params, belief_size)

    out = symbolic_observation_model(belief, state, prepared)
    out = jax.block_until_ready(out)
    ref = _reference(belief, state, params)
    assert out.shape == (batch, observation_size)
    assert jnp.allclose(out, ref, atol=1e-5, rtol=1e-5), "mismatch vs reference"

    # Batched (time, batch) rollout path: flattened into one kernel launch.
    T = 5
    belief_tb = jax.random.normal(k_b2, (T, batch, belief_size), jnp.float32)
    state_tb = jax.random.normal(k_s2, (T, batch, state_size), jnp.float32)
    out_tb = symbolic_observation_model(belief_tb, state_tb, prepared)
    out_tb = jax.block_until_ready(out_tb)
    ref_tb = _reference(belief_tb, state_tb, params)
    assert out_tb.shape == (T, batch, observation_size)
    assert jnp.allclose(out_tb, ref_tb, atol=1e-5, rtol=1e-5), "mismatch (batched)"

    # Optional bf16 MXU path (weights/activations bf16, f32 accumulation);
    # looser tolerance since numerics legitimately differ from f32 reference.
    prepared_bf16 = prepare_params(params, belief_size,
                                   compute_dtype=jnp.bfloat16)
    out_bf16 = symbolic_observation_model(belief_tb, state_tb, prepared_bf16)
    out_bf16 = jax.block_until_ready(out_bf16)
    assert out_bf16.shape == (T, batch, observation_size)
    assert jnp.allclose(out_bf16.astype(jnp.float32), ref_tb,
                        atol=1e-1, rtol=1e-1), "mismatch (bf16 path)"

    print("KERNEL_OK")
</pallas_src>

<mosaic_0001>
module attributes {stable_mosaic.version = 11 : i64} {
  func.func @_mlp_kernel(%arg0: i32, %arg1: memref<8x32xf32, #tpu.memory_space<vmem>>, %arg2: memref<8x16xf32, #tpu.memory_space<vmem>>, %arg3: memref<32x128xf32, #tpu.memory_space<vmem>>, %arg4: memref<16x128xf32, #tpu.memory_space<vmem>>, %arg5: memref<1x128xf32, #tpu.memory_space<vmem>>, %arg6: memref<128x128xf32, #tpu.memory_space<vmem>>, %arg7: memref<1x128xf32, #tpu.memory_space<vmem>>, %arg8: memref<128x128xf32, #tpu.memory_space<vmem>>, %arg9: memref<1x128xf32, #tpu.memory_space<vmem>>, %arg10: memref<8x128xf32, #tpu.memory_space<vmem>>) attributes {dimension_semantics = [#tpu.dimension_semantics<parallel>], iteration_bounds = array<i64: 1>, scalar_prefetch = 0 : i64, scratch_operands = 0 : i64, tpu.core_type = #tpu.core_type<tc>, window_params = [{transform_indices = @transform_0, window_bounds = array<i64: 8, 32>}, {transform_indices = @transform_1, window_bounds = array<i64: 8, 16>}, {pipeline_mode = #tpu.pipeline_mode<synchronous>, transform_indices = @transform_2, window_bounds = array<i64: 32, 128>}, {pipeline_mode = #tpu.pipeline_mode<synchronous>, transform_indices = @transform_3, window_bounds = array<i64: 16, 128>}, {pipeline_mode = #tpu.pipeline_mode<synchronous>, transform_indices = @transform_4, window_bounds = array<i64: 1, 128>}, {pipeline_mode = #tpu.pipeline_mode<synchronous>, transform_indices = @transform_5, window_bounds = array<i64: 128, 128>}, {pipeline_mode = #tpu.pipeline_mode<synchronous>, transform_indices = @transform_6, window_bounds = array<i64: 1, 128>}, {pipeline_mode = #tpu.pipeline_mode<synchronous>, transform_indices = @transform_7, window_bounds = array<i64: 128, 128>}, {pipeline_mode = #tpu.pipeline_mode<synchronous>, transform_indices = @transform_8, window_bounds = array<i64: 1, 128>}, {transform_indices = @transform_9, window_bounds = array<i64: 8, 128>}]} {
    %c0 = arith.constant 0 : index
    %c0_0 = arith.constant 0 : index
    %0 = vector.load %arg1[%c0, %c0_0] : memref<8x32xf32, #tpu.memory_space<vmem>>, vector<8x32xf32>
    %c0_1 = arith.constant 0 : index
    %c0_2 = arith.constant 0 : index
    %1 = vector.load %arg3[%c0_1, %c0_2] : memref<32x128xf32, #tpu.memory_space<vmem>>, vector<32x128xf32>
    %cst = arith.constant dense<0.000000e+00> : vector<8x128xf32>
    %2 = tpu.matmul %0, %1, %cst {dimension_numbers = #tpu.dot_dimension_numbers<[1], [0], [0], [1], [0, 0, 1, 1], [], []>} : vector<8x32xf32>, vector<32x128xf32>, vector<8x128xf32> -> vector<8x128xf32>
    %c0_3 = arith.constant 0 : index
    %c0_4 = arith.constant 0 : index
    %3 = vector.load %arg2[%c0_3, %c0_4] : memref<8x16xf32, #tpu.memory_space<vmem>>, vector<8x16xf32>
    %c0_5 = arith.constant 0 : index
    %c0_6 = arith.constant 0 : index
    %4 = vector.load %arg4[%c0_5, %c0_6] : memref<16x128xf32, #tpu.memory_space<vmem>>, vector<16x128xf32>
    %cst_7 = arith.constant dense<0.000000e+00> : vector<8x128xf32>
    %5 = tpu.matmul %3, %4, %cst_7 {dimension_numbers = #tpu.dot_dimension_numbers<[1], [0], [0], [1], [0, 0, 1, 1], [], []>} : vector<8x16xf32>, vector<16x128xf32>, vector<8x128xf32> -> vector<8x128xf32>
    %6 = arith.addf %2, %5 : vector<8x128xf32>
    %c0_8 = arith.constant 0 : index
    %c0_9 = arith.constant 0 : index
    %7 = vector.load %arg5[%c0_8, %c0_9] : memref<1x128xf32, #tpu.memory_space<vmem>>, vector<1x128xf32>
    %8 = vector.broadcast %7 : vector<1x128xf32> to vector<8x128xf32>
    %9 = arith.addf %6, %8 : vector<8x128xf32>
    %cst_10 = arith.constant 0.000000e+00 : f32
    %10 = vector.broadcast %cst_10 : f32 to vector<8x128xf32>
    %11 = arith.maximumf %9, %10 : vector<8x128xf32>
    %c0_11 = arith.constant 0 : index
    %c0_12 = arith.constant 0 : index
    %12 = vector.load %arg6[%c0_11, %c0_12] : memref<128x128xf32, #tpu.memory_space<vmem>>, vector<128x128xf32>
    %cst_13 = arith.constant dense<0.000000e+00> : vector<8x128xf32>
    %13 = tpu.matmul %11, %12, %cst_13 {dimension_numbers = #tpu.dot_dimension_numbers<[1], [0], [0], [1], [0, 0, 1, 1], [], []>} : vector<8x128xf32>, vector<128x128xf32>, vector<8x128xf32> -> vector<8x128xf32>
    %c0_14 = arith.constant 0 : index
    %c0_15 = arith.constant 0 : index
    %14 = vector.load %arg7[%c0_14, %c0_15] : memref<1x128xf32, #tpu.memory_space<vmem>>, vector<1x128xf32>
    %15 = vector.broadcast %14 : vector<1x128xf32> to vector<8x128xf32>
    %16 = arith.addf %13, %15 : vector<8x128xf32>
    %cst_16 = arith.constant 0.000000e+00 : f32
    %17 = vector.broadcast %cst_16 : f32 to vector<8x128xf32>
    %18 = arith.maximumf %16, %17 : vector<8x128xf32>
    %c0_17 = arith.constant 0 : index
    %c0_18 = arith.constant 0 : index
    %19 = vector.load %arg8[%c0_17, %c0_18] : memref<128x128xf32, #tpu.memory_space<vmem>>, vector<128x128xf32>
    %cst_19 = arith.constant dense<0.000000e+00> : vector<8x128xf32>
    %20 = tpu.matmul %18, %19, %cst_19 {dimension_numbers = #tpu.dot_dimension_numbers<[1], [0], [0], [1], [0, 0, 1, 1], [], []>} : vector<8x128xf32>, vector<128x128xf32>, vector<8x128xf32> -> vector<8x128xf32>
    %c0_20 = arith.constant 0 : index
    %c0_21 = arith.constant 0 : index
    %21 = vector.load %arg9[%c0_20, %c0_21] : memref<1x128xf32, #tpu.memory_space<vmem>>, vector<1x128xf32>
    %22 = vector.broadcast %21 : vector<1x128xf32> to vector<8x128xf32>
    %23 = arith.addf %20, %22 : vector<8x128xf32>
    %c0_22 = arith.constant 0 : index
    %c0_23 = arith.constant 0 : index
    %24 = vector.load %arg10[%c0_22, %c0_23] : memref<8x128xf32, #tpu.memory_space<vmem>>, vector<8x128xf32>
    tpu.vector_store %arg10[%c0_22, %c0_23], %23 {strides = array<i32>} : memref<8x128xf32, #tpu.memory_space<vmem>>, vector<8x128xf32>,
    return
  }
  func.func @transform_0(%arg0: i32) -> (i32, i32) {
    %c0_i32 = arith.constant 0 : i32
    %c0_i32_0 = arith.constant 0 : i32
    return %arg0, %c0_i32 : i32, i32
  }
  func.func @transform_1(%arg0: i32) -> (i32, i32) {
    %c0_i32 = arith.constant 0 : i32
    %c0_i32_0 = arith.constant 0 : i32
    return %arg0, %c0_i32 : i32, i32
  }
  func.func @transform_2(%arg0: i32) -> (i32, i32) {
    %c0_i32 = arith.constant 0 : i32
    %c0_i32_0 = arith.constant 0 : i32
    %c0_i32_1 = arith.constant 0 : i32
    return %c0_i32, %c0_i32_0 : i32, i32
  }
  func.func @transform_3(%arg0: i32) -> (i32, i32) {
    %c0_i32 = arith.constant 0 : i32
    %c0_i32_0 = arith.constant 0 : i32
    %c0_i32_1 = arith.constant 0 : i32
    return %c0_i32, %c0_i32_0 : i32, i32
  }
  func.func @transform_4(%arg0: i32) -> (i32, i32) {
    %c0_i32 = arith.constant 0 : i32
    %c0_i32_0 = arith.constant 0 : i32
    %c0_i32_1 = arith.constant 0 : i32
    return %c0_i32, %c0_i32_0 : i32, i32
  }
  func.func @transform_5(%arg0: i32) -> (i32, i32) {
    %c0_i32 = arith.constant 0 : i32
    %c0_i32_0 = arith.constant 0 : i32
    %c0_i32_1 = arith.constant 0 : i32
    return %c0_i32, %c0_i32_0 : i32, i32
  }
  func.func @transform_6(%arg0: i32) -> (i32, i32) {
    %c0_i32 = arith.constant 0 : i32
    %c0_i32_0 = arith.constant 0 : i32
    %c0_i32_1 = arith.constant 0 : i32
    return %c0_i32, %c0_i32_0 : i32, i32
  }
  func.func @transform_7(%arg0: i32) -> (i32, i32) {
    %c0_i32 = arith.constant 0 : i32
    %c0_i32_0 = arith.constant 0 : i32
    %c0_i32_1 = arith.constant 0 : i32
    return %c0_i32, %c0_i32_0 : i32, i32
  }
  func.func @transform_8(%arg0: i32) -> (i32, i32) {
    %c0_i32 = arith.constant 0 : i32
    %c0_i32_0 = arith.constant 0 : i32
    %c0_i32_1 = arith.constant 0 : i32
    return %c0_i32, %c0_i32_0 : i32, i32
  }
  func.func @transform_9(%arg0: i32) -> (i32, i32) {
    %c0_i32 = arith.constant 0 : i32
    %c0_i32_0 = arith.constant 0 : i32
    return %arg0, %c0_i32 : i32, i32
  }
}

</mosaic_0001>

<llo_original>
// kernel: tpu_custom_call.1
$region0: #{tpu_custom_call.1}
  #allocation0 [shape = 'u32[]', space=smem, size = 0x4, offset = 0x4, fixed_abs, tag = 'smem constant byte address 0x4 - core index']
  #allocation1 [shape = 'u32[144,128]{1,0:T(1,128)}', space=vmem, size = 0x12000, scoped, tag = 'internal scratch']
  %s0 = inlined_call_operand.hbm [shape: f32[8,32], index: 0, kind: input, shape index: {}]
  %s1 = inlined_call_operand.hbm [shape: f32[8,16], index: 1, kind: input, shape index: {}]
  %s2 = inlined_call_operand.hbm [shape: f32[32,128], index: 2, kind: input, shape index: {}]
  %s3 = inlined_call_operand.hbm [shape: f32[16,128], index: 3, kind: input, shape index: {}]
  %s4 = inlined_call_operand.vmem [shape: f32[1,128], index: 4, kind: input, shape index: {}]
  %s5 = inlined_call_operand.hbm [shape: f32[128,128], index: 5, kind: input, shape index: {}]
  %s6 = inlined_call_operand.vmem [shape: f32[1,128], index: 6, kind: input, shape index: {}]
  %s7 = inlined_call_operand.hbm [shape: f32[128,128], index: 7, kind: input, shape index: {}]
  %s8 = inlined_call_operand.vmem [shape: f32[1,128], index: 8, kind: input, shape index: {}]
  %s9 = inlined_call_operand.hbm [shape: f32[8,128], index: 9, kind: output, shape index: {}]
  %s10 = sld [smem:[#allocation0]]
  $region70: #{tpu_custom_call.1} parent=0
    _
  %s12 = ssub.s32 1, %s10
  %s13 = scalar_select 0, %s12, %s10
  $region1: #{tpu_custom_call.1} parent=0
    #allocation2 [shape = 'u8[4096]{0}', space=vmem, size = 0x1000, scoped, tag = 'input window, operand 0, single buffered']
    #allocation3 [shape = 's32[1]{0}', space=sflag, size = 0x4, scoped, tag = 'scoped memory for tpu_custom_call.1']
    #allocation4 [shape = 's32[1]{0}', space=sflag, size = 0x4, scoped, tag = 'scoped memory for tpu_custom_call.1']
    #allocation5 [shape = 'u8[4096]{0}', space=vmem, size = 0x1000, scoped, tag = 'input window, operand 1, single buffered']
    #allocation6 [shape = 's32[1]{0}', space=sflag, size = 0x4, scoped, tag = 'scoped memory for tpu_custom_call.1']
    #allocation7 [shape = 'u8[16384]{0}', space=vmem, size = 0x4000, scoped, tag = 'input window, operand 2, single buffered']
    #allocation8 [shape = 'u8[8192]{0}', space=vmem, size = 0x2000, scoped, tag = 'input window, operand 3, single buffered']
    #allocation9 [shape = 's32[1]{0}', space=sflag, size = 0x4, scoped, tag = 'scoped memory for tpu_custom_call.1']
    #allocation10 [shape = 'u8[65536]{0}', space=vmem, size = 0x10000, scoped, tag = 'input window, operand 5, single buffered']
    #allocation11 [shape = 'u8[65536]{0}', space=vmem, size = 0x10000, scoped, tag = 'input window, operand 7, single buffered']
    #allocation12 [shape = 's32[1]{0}', space=sflag, size = 0x4, scoped, tag = 'scoped memory for tpu_custom_call.1']
    #allocation13 [shape = 'u8[4096]{0}', space=vmem, size = 0x1000, scoped, tag = 'output window, operand 0, single buffered']
    %14 = vsyncpa [#allocation3], 0
    %15 = vsyncpa [#allocation6], 0
    %16 = vsyncpa [#allocation9], 0
    %17 = vsyncpa [#allocation12], 0
    %18 = vsyncpa [#allocation4], 0
    // Predicated region
    $region2: #{tpu_custom_call.1} parent=1 // pred_check
      _
    $region3: #{tpu_custom_call.1} parent=1 // pred_check_branch
      %20 = sbr.rel (0) target = $region5
    $region4: #{tpu_custom_call.1} parent=1 // pred_region
      %s22 = ssub.s32 128, 128
      %23 = vsyncadd [#allocation3], %s22
      %s25 = sshll.u32 [#allocation2], 4
      %s26 = int_to_ptr.vmem [resolvable:$true] %s25
      %28 = dma.hbm_to_vmem [thread:$0]  %s0, 128, %s26, [#allocation3]
    $region5: #{tpu_custom_call.1} parent=1 // pred_fallthru
      _
    // Predicated region
    $region6: #{tpu_custom_call.1} parent=1 // pred_check
      _
    $region7: #{tpu_custom_call.1} parent=1 // pred_check_branch
      %30 = sbr.rel (0) target = $region9
    $region8: #{tpu_custom_call.1} parent=1 // pred_region
      %s32 = ssub.s32 128, 128
      %33 = vsyncadd [#allocation6], %s32
      %s35 = sshll.u32 [#allocation5], 4
      %s36 = int_to_ptr.vmem [resolvable:$true] %s35
      %38 = dma.hbm_to_vmem [thread:$0]  %s1, 128, %s36, [#allocation6]
    $region9: #{tpu_custom_call.1} parent=1 // pred_fallthru
      _
    // Predicated region
    $region10: #{tpu_custom_call.1} parent=1 // pred_check
      _
    $region11: #{tpu_custom_call.1} parent=1 // pred_check_branch
      %40 = sbr.rel (0) target = $region13
    $region12: #{tpu_custom_call.1} parent=1 // pred_region
      %s42 = ssub.s32 512, 512
      %43 = vsyncadd [#allocation6], %s42
      %s44 = sshll.u32 [#allocation7], 4
      %s45 = int_to_ptr.vmem [resolvable:$true] %s44
      %50 = dma.hbm_to_vmem [thread:$0]  %s2, 512, %s45, [#allocation6], 128, 128, 8
    $region13: #{tpu_custom_call.1} parent=1 // pred_fallthru
      _
    // Predicated region
    $region14: #{tpu_custom_call.1} parent=1 // pred_check
      _
    $region15: #{tpu_custom_call.1} parent=1 // pred_check_branch
      %52 = sbr.rel (0) target = $region17
    $region16: #{tpu_custom_call.1} parent=1 // pred_region
      %s54 = ssub.s32 256, 256
      %55 = vsyncadd [#allocation9], %s54
      %s56 = sshll.u32 [#allocation8], 4
      %s57 = int_to_ptr.vmem [resolvable:$true] %s56
      %62 = dma.hbm_to_vmem [thread:$0]  %s3, 256, %s57, [#allocation9], 128, 128, 8
    $region17: #{tpu_custom_call.1} parent=1 // pred_fallthru
      _
    // Predicated region
    $region18: #{tpu_custom_call.1} parent=1 // pred_check
      _
    $region19: #{tpu_custom_call.1} parent=1 // pred_check_branch
      %64 = sbr.rel (0) target = $region21
    $region20: #{tpu_custom_call.1} parent=1 // pred_region
      _
    $region21: #{tpu_custom_call.1} parent=1 // pred_fallthru
      _
    // Predicated region
    $region22: #{tpu_custom_call.1} parent=1 // pred_check
      _
    $region23: #{tpu_custom_call.1} parent=1 // pred_check_branch
      %66 = sbr.rel (0) target = $region25
    $region24: #{tpu_custom_call.1} parent=1 // pred_region
      %s68 = ssub.s32 2048, 2048
      %69 = vsyncadd [#allocation9], %s68
      %s70 = sshll.u32 [#allocation10], 4
      %s71 = int_to_ptr.vmem [resolvable:$true] %s70
      %76 = dma.hbm_to_vmem [thread:$0]  %s5, 2048, %s71, [#allocation9], 128, 128, 8
    $region25: #{tpu_custom_call.1} parent=1 // pred_fallthru
      _
    // Predicated region
    $region26: #{tpu_custom_call.1} parent=1 // pred_check
      _
    $region27: #{tpu_custom_call.1} parent=1 // pred_check_branch
      %78 = sbr.rel (0) target = $region29
    $region28: #{tpu_custom_call.1} parent=1 // pred_region
      _
    $region29: #{tpu_custom_call.1} parent=1 // pred_fallthru
      _
    // Predicated region
    $region30: #{tpu_custom_call.1} parent=1 // pred_check
      _
    $region31: #{tpu_custom_call.1} parent=1 // pred_check_branch
      %80 = sbr.rel (0) target = $region33
    $region32: #{tpu_custom_call.1} parent=1 // pred_region
      %s82 = ssub.s32 2048, 2048
      %83 = vsyncadd [#allocation12], %s82
      %s84 = sshll.u32 [#allocation11], 4
      %s85 = int_to_ptr.vmem [resolvable:$true] %s84
      %90 = dma.hbm_to_vmem [thread:$0]  %s7, 2048, %s85, [#allocation12], 128, 128, 8
    $region33: #{tpu_custom_call.1} parent=1 // pred_fallthru
      _
    // Predicated region
    $region34: #{tpu_custom_call.1} parent=1 // pred_check
      _
    $region35: #{tpu_custom_call.1} parent=1 // pred_check_branch
      %92 = sbr.rel (0) target = $region37
    $region36: #{tpu_custom_call.1} parent=1 // pred_region
      _
    $region37: #{tpu_custom_call.1} parent=1 // pred_fallthru
      _
    // Predicated region
    $region38: #{tpu_custom_call.1} parent=1 // pred_check
      _
    $region39: #{tpu_custom_call.1} parent=1 // pred_check_branch
      %94 = sbr.rel (0) target = $region41
    $region40: #{tpu_custom_call.1} parent=1 // pred_region
      %95 = dma.done [#allocation3], 128
    $region41: #{tpu_custom_call.1} parent=1 // pred_fallthru
      _
    // Predicated region
    $region42: #{tpu_custom_call.1} parent=1 // pred_check
      _
    $region43: #{tpu_custom_call.1} parent=1 // pred_check_branch
      %97 = sbr.rel (0) target = $region45
    $region44: #{tpu_custom_call.1} parent=1 // pred_region
      %98 = dma.done [#allocation6], 128
    $region45: #{tpu_custom_call.1} parent=1 // pred_fallthru
      _
    // Predicated region
    $region46: #{tpu_custom_call.1} parent=1 // pred_check
      _
    $region47: #{tpu_custom_call.1} parent=1 // pred_check_branch
      %100 = sbr.rel (0) target = $region49
    $region48: #{tpu_custom_call.1} parent=1 // pred_region
      %101 = dma.done [#allocation6], 512
    $region49: #{tpu_custom_call.1} parent=1 // pred_fallthru
      _
    // Predicated region
    $region50: #{tpu_custom_call.1} parent=1 // pred_check
      _
    $region51: #{tpu_custom_call.1} parent=1 // pred_check_branch
      %103 = sbr.rel (0) target = $region53
    $region52: #{tpu_custom_call.1} parent=1 // pred_region
      %104 = dma.done [#allocation9], 256
    $region53: #{tpu_custom_call.1} parent=1 // pred_fallthru
      _
    // Predicated region
    $region54: #{tpu_custom_call.1} parent=1 // pred_check
      _
    $region55: #{tpu_custom_call.1} parent=1 // pred_check_branch
      %106 = sbr.rel (0) target = $region57
    $region56: #{tpu_custom_call.1} parent=1 // pred_region
      %107 = dma.done [#allocation9], 2048
    $region57: #{tpu_custom_call.1} parent=1 // pred_fallthru
      _
    // Predicated region
    $region58: #{tpu_custom_call.1} parent=1 // pred_check
      _
    $region59: #{tpu_custom_call.1} parent=1 // pred_check_branch
      %109 = sbr.rel (0) target = $region61
    $region60: #{tpu_custom_call.1} parent=1 // pred_region
      %110 = dma.done [#allocation12], 2048
    $region61: #{tpu_custom_call.1} parent=1 // pred_fallthru
      _
    %v111 = vld [vmem:[#allocation2] sm:$0xff]
    %v112 = vld [vmem:[#allocation7] sm:$0xff]
    %v113 = vld [vmem:[#allocation7 + $0x8] sm:$0xff]
    %v114 = vld [vmem:[#allocation7 + $0x10] sm:$0xff]
    %v115 = vld [vmem:[#allocation7 + $0x18] sm:$0xff]
    %v116 = vld [vmem:[#allocation5] sm:$0xff]
    %v117 = vld [vmem:[#allocation8] sm:$0xff]
    %v118 = vld [vmem:[#allocation8 + $0x8] sm:$0xff]
    %vm119 = vcmask 130048
    %v121 = vsel %vm119, %v116, 0
    %123 = vmatprep.subr.mxu0 0.0
    %124 = vmatpush1.msra.mxu0 %v117
    %125 = vmatprep.subr.mxu0 0.0
    %126 = vmatpush1.msra.mxu0 %v118
    %127 = vmatprep.subr.mxu0 0.0
    %128 = vmatpush1.msra.mxu0 0.0
    %129 = vmatprep.subr.mxu0 0.0
    %130 = vmatpush1.msra.mxu0 0.0
    %131 = vmatprep.subr.mxu0 0.0
    %132 = vmatpush1.msra.mxu0 0.0
    %133 = vmatprep.subr.mxu0 0.0
    %134 = vmatpush1.msra.mxu0 0.0
    %135 = vmatprep.subr.mxu0 0.0
    %136 = vmatpush1.msra.mxu0 0.0
    %137 = vmatprep.subr.mxu0 0.0
    %138 = vmatpush1.msra.mxu0 0.0
    %139 = vmatprep.subr.mxu0 0.0
    %140 = vmatpush1.msra.mxu0 0.0
    %141 = vmatprep.subr.mxu0 0.0
    %142 = vmatpush1.msra.mxu0 0.0
    %143 = vmatprep.subr.mxu0 0.0
    %144 = vmatpush1.msra.mxu0 0.0
    %145 = vmatprep.subr.mxu0 0.0
    %146 = vmatpush1.msra.mxu0 0.0
    %147 = vmatprep.subr.mxu0 0.0
    %148 = vmatpush1.msra.mxu0 0.0
    %149 = vmatprep.subr.mxu0 0.0
    %150 = vmatpush1.msra.mxu0 0.0
    %151 = vmatprep.subr.mxu0 0.0
    %152 = vmatpush1.msra.mxu0 0.0
    %153 = vmatprep.subr.mxu0 0.0
    %154 = vmatpush1.msra.mxu0 0.0
    %155 = vmatprep.subr.mxu0 0.0
    %156 = vmatpush1.msra.mxu0 0.0
    %157 = vmatprep.subr.mxu0 0.0
    %158 = vmatpush1.msra.mxu0 0.0
    %159 = vmatprep.subr.mxu0 0.0
    %160 = vmatpush1.msra.mxu0 0.0
    %161 = vmatprep.subr.mxu0 0.0
    %162 = vmatpush1.msra.mxu0 0.0
    %163 = vmatprep.subr.mxu0 0.0
    %164 = vmatpush1.msra.mxu0 0.0
    %165 = vmatprep.subr.mxu0 0.0
    %166 = vmatpush1.msra.mxu0 0.0
    %167 = vmatprep.subr.mxu0 0.0
    %168 = vmatpush1.msra.mxu0 0.0
    %169 = vmatprep.subr.mxu0 0.0
    %170 = vmatpush1.msra.mxu0 0.0
    %171 = vmatprep.subr.mxu0 0.0
    %172 = vmatpush1.msra.mxu0 0.0
    %173 = vmatprep.subr.mxu0 0.0
    %174 = vmatpush1.msra.mxu0 0.0
    %175 = vmatprep.subr.mxu0 0.0
    %176 = vmatpush1.msra.mxu0 0.0
    %177 = vmatprep.subr.mxu0 0.0
    %178 = vmatpush1.msra.mxu0 0.0
    %179 = vmatprep.subr.mxu0 0.0
    %180 = vmatpush1.msra.mxu0 0.0
    %181 = vmatprep.subr.mxu0 0.0
    %182 = vmatpush1.msra.mxu0 0.0
    %183 = vmatprep.subr.mxu0 0.0
    %184 = vmatpush1.msra.mxu0 0.0
    %185 = vmatprep.subr.mxu0 0.0
    %186 = vmatpush1.msra.mxu0 0.0
    %187 = vmatprep.mubr.f32.mxu0 0.0
    %188 = vmatmul.mubr.f32.gmra.mrb[0].mxu0 %v121
    %v189 = vpop.f32.mrb[0].mxu0
    %v190 = vadd.f32 0.0, %v189
    %v191 = vpop.f32.mrb[0].mxu0
    %192 = vdwg.mxu0
    %vm193 = vcmask 261120
    %v195 = vsel %vm193, %v111, 0
    %197 = vmatprep.subr.mxu0 0.0
    %198 = vmatpush1.msra.mxu0 %v112
    %199 = vmatprep.subr.mxu0 0.0
    %200 = vmatpush1.msra.mxu0 %v113
    %201 = vmatprep.subr.mxu0 0.0
    %202 = vmatpush1.msra.mxu0 %v114
    %203 = vmatprep.subr.mxu0 0.0
    %204 = vmatpush1.msra.mxu0 %v115
    %205 = vmatprep.subr.mxu0 0.0
    %206 = vmatpush1.msra.mxu0 0.0
    %207 = vmatprep.subr.mxu0 0.0
    %208 = vmatpush1.msra.mxu0 0.0
    %209 = vmatprep.subr.mxu0 0.0
    %210 = vmatpush1.msra.mxu0 0.0
    %211 = vmatprep.subr.mxu0 0.0
    %212 = vmatpush1.msra.mxu0 0.0
    %213 = vmatprep.subr.mxu0 0.0
    %214 = vmatpush1.msra.mxu0 0.0
    %215 = vmatprep.subr.mxu0 0.0
    %216 = vmatpush1.msra.mxu0 0.0
    %217 = vmatprep.subr.mxu0 0.0
    %218 = vmatpush1.msra.mxu0 0.0
    %219 = vmatprep.subr.mxu0 0.0
    %220 = vmatpush1.msra.mxu0 0.0
    %221 = vmatprep.subr.mxu0 0.0
    %222 = vmatpush1.msra.mxu0 0.0
    %223 = vmatprep.subr.mxu0 0.0
    %224 = vmatpush1.msra.mxu0 0.0
    %225 = vmatprep.subr.mxu0 0.0
    %226 = vmatpush1.msra.mxu0 0.0
    %227 = vmatprep.subr.mxu0 0.0
    %228 = vmatpush1.msra.mxu0 0.0
    %229 = vmatprep.subr.mxu0 0.0
    %230 = vmatpush1.msra.mxu0 0.0
    %231 = vmatprep.subr.mxu0 0.0
    %232 = vmatpush1.msra.mxu0 0.0
    %233 = vmatprep.subr.mxu0 0.0
    %234 = vmatpush1.msra.mxu0 0.0
    %235 = vmatprep.subr.mxu0 0.0
    %236 = vmatpush1.msra.mxu0 0.0
    %237 = vmatprep.subr.mxu0 0.0
    %238 = vmatpush1.msra.mxu0 0.0
    %239 = vmatprep.subr.mxu0 0.0
    %240 = vmatpush1.msra.mxu0 0.0
    %241 = vmatprep.subr.mxu0 0.0
    %242 = vmatpush1.msra.mxu0 0.0
    %243 = vmatprep.subr.mxu0 0.0
    %244 = vmatpush1.msra.mxu0 0.0
    %245 = vmatprep.subr.mxu0 0.0
    %246 = vmatpush1.msra.mxu0 0.0
    %247 = vmatprep.subr.mxu0 0.0
    %248 = vmatpush1.msra.mxu0 0.0
    %249 = vmatprep.subr.mxu0 0.0
    %250 = vmatpush1.msra.mxu0 0.0
    %251 = vmatprep.subr.mxu0 0.0
    %252 = vmatpush1.msra.mxu0 0.0
    %253 = vmatprep.subr.mxu0 0.0
    %254 = vmatpush1.msra.mxu0 0.0
    %255 = vmatprep.subr.mxu0 0.0
    %256 = vmatpush1.msra.mxu0 0.0
    %257 = vmatprep.subr.mxu0 0.0
    %258 = vmatpush1.msra.mxu0 0.0
    %259 = vmatprep.subr.mxu0 0.0
    %260 = vmatpush1.msra.mxu0 0.0
    %261 = vmatprep.mubr.f32.mxu0 0.0
    %262 = vmatmul.mubr.f32.gmra.mrb[0].mxu0 %v195
    %v263 = vpop.f32.mrb[0].mxu0
    %v264 = vadd.f32 %v190, %v263
    %v265 = vpop.f32.mrb[0].mxu0
    %266 = vdwg.mxu0
    %v267 = vld [vmem:[%s4] sm:$0x1]
    %v269 = vlaneseq
    %v270 = vshrl.u32 %v269, 7
    %v271 = vsub.s32 0, %v270
    %v272 = vrot.slane %v267, %v271
    %v274 = vadd.f32 %v264, %v272
    %v275 = vmax.f32 %v274, 0.0
    %v276 = vld [vmem:[#allocation10] sm:$0xff]
    %v277 = vld [vmem:[#allocation10 + $0x8] sm:$0xff]
    %v278 = vld [vmem:[#allocation10 + $0x10] sm:$0xff]
    %v279 = vld [vmem:[#allocation10 + $0x18] sm:$0xff]
    %v280 = vld [vmem:[#allocation10 + $0x20] sm:$0xff]
    %v281 = vld [vmem:[#allocation10 + $0x28] sm:$0xff]
    %v282 = vld [vmem:[#allocation10 + $0x30] sm:$0xff]
    %v283 = vld [vmem:[#allocation10 + $0x38] sm:$0xff]
    %v284 = vld [vmem:[#allocation10 + $0x40] sm:$0xff]
    %v285 = vld [vmem:[#allocation10 + $0x48] sm:$0xff]
    %v286 = vld [vmem:[#allocation10 + $0x50] sm:$0xff]
    %v287 = vld [vmem:[#allocation10 + $0x58] sm:$0xff]
    %v288 = vld [vmem:[#allocation10 + $0x60] sm:$0xff]
    %v289 = vld [vmem:[#allocation10 + $0x68] sm:$0xff]
    %v290 = vld [vmem:[#allocation10 + $0x70] sm:$0xff]
    %v291 = vld [vmem:[#allocation10 + $0x78] sm:$0xff]
    %v292 = vld [vmem:[%s6] sm:$0x1]
    %v294 = vlaneseq
    %v295 = vshrl.u32 %v294, 7
    %v296 = vsub.s32 0, %v295
    %v297 = vrot.slane %v292, %v296
    %299 = vmatprep.subr.mxu0 0.0
    %300 = vmatpush1.msra.mxu0 %v276
    %301 = vmatprep.subr.mxu0 0.0
    %302 = vmatpush1.msra.mxu0 %v277
    %303 = vmatprep.subr.mxu0 0.0
    %304 = vmatpush1.msra.mxu0 %v278
    %305 = vmatprep.subr.mxu0 0.0
    %306 = vmatpush1.msra.mxu0 %v279
    %307 = vmatprep.subr.mxu0 0.0
    %308 = vmatpush1.msra.mxu0 %v280
    %309 = vmatprep.subr.mxu0 0.0
    %310 = vmatpush1.msra.mxu0 %v281
    %311 = vmatprep.subr.mxu0 0.0
    %312 = vmatpush1.msra.mxu0 %v282
    %313 = vmatprep.subr.mxu0 0.0
    %314 = vmatpush1.msra.mxu0 %v283
    %315 = vmatprep.subr.mxu0 0.0
    %316 = vmatpush1.msra.mxu0 %v284
    %317 = vmatprep.subr.mxu0 0.0
    %318 = vmatpush1.msra.mxu0 %v285
    %319 = vmatprep.subr.mxu0 0.0
    %320 = vmatpush1.msra.mxu0 %v286
    %321 = vmatprep.subr.mxu0 0.0
    %322 = vmatpush1.msra.mxu0 %v287
    %323 = vmatprep.subr.mxu0 0.0
    %324 = vmatpush1.msra.mxu0 %v288
    %325 = vmatprep.subr.mxu0 0.0
    %326 = vmatpush1.msra.mxu0 %v289
    %327 = vmatprep.subr.mxu0 0.0
    %328 = vmatpush1.msra.mxu0 %v290
    %329 = vmatprep.subr.mxu0 0.0
    %330 = vmatpush1.msra.mxu0 %v291
    %331 = vmatprep.subr.mxu0 0.0
    %332 = vmatpush1.msra.mxu0 0.0
    %333 = vmatprep.subr.mxu0 0.0
    %334 = vmatpush1.msra.mxu0 0.0
    %335 = vmatprep.subr.mxu0 0.0
    %336 = vmatpush1.msra.mxu0 0.0
    %337 = vmatprep.subr.mxu0 0.0
    %338 = vmatpush1.msra.mxu0 0.0
    %339 = vmatprep.subr.mxu0 0.0
    %340 = vmatpush1.msra.mxu0 0.0
    %341 = vmatprep.subr.mxu0 0.0
    %342 = vmatpush1.msra.mxu0 0.0
    %343 = vmatprep.subr.mxu0 0.0
    %344 = vmatpush1.msra.mxu0 0.0
    %345 = vmatprep.subr.mxu0 0.0
    %346 = vmatpush1.msra.mxu0 0.0
    %347 = vmatprep.subr.mxu0 0.0
    %348 = vmatpush1.msra.mxu0 0.0
    %349 = vmatprep.subr.mxu0 0.0
    %350 = vmatpush1.msra.mxu0 0.0
    %351 = vmatprep.subr.mxu0 0.0
    %352 = vmatpush1.msra.mxu0 0.0
    %353 = vmatprep.subr.mxu0 0.0
    %354 = vmatpush1.msra.mxu0 0.0
    %355 = vmatprep.subr.mxu0 0.0
    %356 = vmatpush1.msra.mxu0 0.0
    %357 = vmatprep.subr.mxu0 0.0
    %358 = vmatpush1.msra.mxu0 0.0
    %359 = vmatprep.subr.mxu0 0.0
    %360 = vmatpush1.msra.mxu0 0.0
    %361 = vmatprep.subr.mxu0 0.0
    %362 = vmatpush1.msra.mxu0 0.0
    %363 = vmatprep.mubr.f32.mxu0 0.0
    %364 = vmatmul.mubr.f32.gmra.mrb[0].mxu0 %v275
    %v365 = vpop.f32.mrb[0].mxu0
    %v366 = vadd.f32 %v297, %v365
    %v367 = vpop.f32.mrb[0].mxu0
    %368 = vdwg.mxu0
    %v369 = vmax.f32 %v366, 0.0
    %v370 = vld [vmem:[#allocation11] sm:$0xff]
    %v371 = vld [vmem:[#allocation11 + $0x8] sm:$0xff]
    %v372 = vld [vmem:[#allocation11 + $0x10] sm:$0xff]
    %v373 = vld [vmem:[#allocation11 + $0x18] sm:$0xff]
    %v374 = vld [vmem:[#allocation11 + $0x20] sm:$0xff]
    %v375 = vld [vmem:[#allocation11 + $0x28] sm:$0xff]
    %v376 = vld [vmem:[#allocation11 + $0x30] sm:$0xff]
    %v377 = vld [vmem:[#allocation11 + $0x38] sm:$0xff]
    %v378 = vld [vmem:[#allocation11 + $0x40] sm:$0xff]
    %v379 = vld [vmem:[#allocation11 + $0x48] sm:$0xff]
    %v380 = vld [vmem:[#allocation11 + $0x50] sm:$0xff]
    %v381 = vld [vmem:[#allocation11 + $0x58] sm:$0xff]
    %v382 = vld [vmem:[#allocation11 + $0x60] sm:$0xff]
    %v383 = vld [vmem:[#allocation11 + $0x68] sm:$0xff]
    %v384 = vld [vmem:[#allocation11 + $0x70] sm:$0xff]
    %v385 = vld [vmem:[#allocation11 + $0x78] sm:$0xff]
    %v386 = vld [vmem:[%s8] sm:$0x1]
    %v388 = vlaneseq
    %v389 = vshrl.u32 %v388, 7
    %v390 = vsub.s32 0, %v389
    %v391 = vrot.slane %v386, %v390
    %393 = vmatprep.subr.mxu0 0.0
    %394 = vmatpush1.msra.mxu0 %v370
    %395 = vmatprep.subr.mxu0 0.0
    %396 = vmatpush1.msra.mxu0 %v371
    %397 = vmatprep.subr.mxu0 0.0
    %398 = vmatpush1.msra.mxu0 %v372
    %399 = vmatprep.subr.mxu0 0.0
    %400 = vmatpush1.msra.mxu0 %v373
    %401 = vmatprep.subr.mxu0 0.0
    %402 = vmatpush1.msra.mxu0 %v374
    %403 = vmatprep.subr.mxu0 0.0
    %404 = vmatpush1.msra.mxu0 %v375
    %405 = vmatprep.subr.mxu0 0.0
    %406 = vmatpush1.msra.mxu0 %v376
    %407 = vmatprep.subr.mxu0 0.0
    %408 = vmatpush1.msra.mxu0 %v377
    %409 = vmatprep.subr.mxu0 0.0
    %410 = vmatpush1.msra.mxu0 %v378
    %411 = vmatprep.subr.mxu0 0.0
    %412 = vmatpush1.msra.mxu0 %v379
    %413 = vmatprep.subr.mxu0 0.0
    %414 = vmatpush1.msra.mxu0 %v380
    %415 = vmatprep.subr.mxu0 0.0
    %416 = vmatpush1.msra.mxu0 %v381
    %417 = vmatprep.subr.mxu0 0.0
    %418 = vmatpush1.msra.mxu0 %v382
    %419 = vmatprep.subr.mxu0 0.0
    %420 = vmatpush1.msra.mxu0 %v383
    %421 = vmatprep.subr.mxu0 0.0
    %422 = vmatpush1.msra.mxu0 %v384
    %423 = vmatprep.subr.mxu0 0.0
    %424 = vmatpush1.msra.mxu0 %v385
    %425 = vmatprep.subr.mxu0 0.0
    %426 = vmatpush1.msra.mxu0 0.0
    %427 = vmatprep.subr.mxu0 0.0
    %428 = vmatpush1.msra.mxu0 0.0
    %429 = vmatprep.subr.mxu0 0.0
    %430 = vmatpush1.msra.mxu0 0.0
    %431 = vmatprep.subr.mxu0 0.0
    %432 = vmatpush1.msra.mxu0 0.0
    %433 = vmatprep.subr.mxu0 0.0
    %434 = vmatpush1.msra.mxu0 0.0
    %435 = vmatprep.subr.mxu0 0.0
    %436 = vmatpush1.msra.mxu0 0.0
    %437 = vmatprep.subr.mxu0 0.0
    %438 = vmatpush1.msra.mxu0 0.0
    %439 = vmatprep.subr.mxu0 0.0
    %440 = vmatpush1.msra.mxu0 0.0
    %441 = vmatprep.subr.mxu0 0.0
    %442 = vmatpush1.msra.mxu0 0.0
    %443 = vmatprep.subr.mxu0 0.0
    %444 = vmatpush1.msra.mxu0 0.0
    %445 = vmatprep.subr.mxu0 0.0
    %446 = vmatpush1.msra.mxu0 0.0
    %447 = vmatprep.subr.mxu0 0.0
    %448 = vmatpush1.msra.mxu0 0.0
    %449 = vmatprep.subr.mxu0 0.0
    %450 = vmatpush1.msra.mxu0 0.0
    %451 = vmatprep.subr.mxu0 0.0
    %452 = vmatpush1.msra.mxu0 0.0
    %453 = vmatprep.subr.mxu0 0.0
    %454 = vmatpush1.msra.mxu0 0.0
    %455 = vmatprep.subr.mxu0 0.0
    %456 = vmatpush1.msra.mxu0 0.0
    %457 = vmatprep.mubr.f32.mxu0 0.0
    %458 = vmatmul.mubr.f32.gmra.mrb[0].mxu0 %v369
    %v459 = vpop.f32.mrb[0].mxu0
    %v460 = vadd.f32 %v391, %v459
    %v461 = vpop.f32.mrb[0].mxu0
    %462 = vdwg.mxu0
    %463 = vst [vmem:[#allocation13] sm:$0xff] %v460
    // Predicated region
    $region62: #{tpu_custom_call.1} parent=1 // pred_check
      _
    $region63: #{tpu_custom_call.1} parent=1 // pred_check_branch
      %465 = sbr.rel (0) target = $region65
    $region64: #{tpu_custom_call.1} parent=1 // pred_region
      %s467 = ssub.s32 128, 128
      %468 = vsyncadd [#allocation4], %s467
      %s470 = sshll.u32 [#allocation13], 4
      %s471 = int_to_ptr.vmem [resolvable:$true] %s470
      %473 = dma.vmem_to_hbm [thread:$0]  %s471, 128, %s9, [#allocation4]
    $region65: #{tpu_custom_call.1} parent=1 // pred_fallthru
      _
    // Predicated region
    $region66: #{tpu_custom_call.1} parent=1 // pred_check
      _
    $region67: #{tpu_custom_call.1} parent=1 // pred_check_branch
      %475 = sbr.rel (0) target = $region69
    $region68: #{tpu_custom_call.1} parent=1 // pred_region
      %476 = dma.done [#allocation4], 128
    $region69: #{tpu_custom_call.1} parent=1 // pred_fallthru
      _
    %477 = vsyncpa [#allocation3], 1
    %478 = vsyncpa [#allocation6], 1
    %479 = vsyncpa [#allocation9], 1
    %480 = vsyncpa [#allocation12], 1
    %481 = vsyncpa [#allocation4], 1

</llo_original>
